<compile_context>
chip_gen: v6e
topology: v6e:2x2x1
jax: 0.10.0
libtpu: 0.0.40
codegen_flags: <defaults>
</compile_context>

<pallas_src>
import functools

import jax
import jax.numpy as jnp
from jax.experimental import pallas as pl
from jax.experimental.pallas import tpu as pltpu

_LANE = 128
_SUBLANE = 8


def _round_up(x, m):
    return ((x + m - 1) // m) * m


def _cdiv(a, b):
    return (a + b - 1) // b


def _mlp_policy_kernel(xT_ref, w1T_ref, w2T_ref, oT_ref, *, compute_dtype):
    # Batch lives on the lane axis; biases are folded into the weights:
    #   xT : [D_pad, TB]     (row D is all-ones; rows > D are zero)
    #   w1T: [H_pad, D_pad]  (col D holds b1; row H is the bias unit -> relu(1)=1)
    #   w2T: [A_pad, H_pad]  (col H holds b2; padded rows/cols are zero)
    #   oT : [A_pad, TB]     lane-dense output slab
    xT = xT_ref[...].astype(compute_dtype)
    w1T = w1T_ref[...].astype(compute_dtype)
    hT = jnp.dot(w1T, xT, preferred_element_type=jnp.float32)     # [H_pad, TB]
    hT = jnp.maximum(hT, 0.0)                                      # F.relu
    w2T = w2T_ref[...].astype(compute_dtype)
    oT = jnp.dot(w2T, hT.astype(compute_dtype),
                 preferred_element_type=jnp.float32)               # [A_pad, TB]
    # output_non_linearity=None -> identity.
    oT_ref[...] = oT.astype(oT_ref.dtype)


def prepare_params(w1, b1, w2, b2, *, param_dtype=jnp.float32):
    """Pad / transpose / bias-fold MlpPolicy weights ONCE (hoisted from forward).

    w1: [D, H], b1: [H] or [1, H], w2: [H, A], b2: [A] or [1, A]
    Returns (w1T_aug [H_pad, D_pad], w2T_aug [A_pad, H_pad], D, A).
    Zero padding + the bias unit make the kernel result exactly
    relu(x @ w1 + b1) @ w2 + b2 on the valid rows/cols.
    """
    D, H = w1.shape
    A = w2.shape[1]
    b1 = jnp.asarray(b1, param_dtype).reshape(H)
    b2 = jnp.asarray(b2, param_dtype).reshape(A)

    D_pad = _round_up(D + 1, _SUBLANE)   # +1: constant-1 row of x carries b1
    H_pad = _round_up(H + 1, _SUBLANE)   # +1: reserved bias hidden unit for b2
    A_pad = _round_up(A, _SUBLANE)

    w1T = jnp.zeros((H_pad, D_pad), param_dtype)
    w1T = w1T.at[:H, :D].set(jnp.asarray(w1, param_dtype).T)
    w1T = w1T.at[:H, D].set(b1)          # b1 picked up by the all-ones x row
    w1T = w1T.at[H, D].set(1.0)          # bias unit: h[H] = relu(1) = 1

    w2T = jnp.zeros((A_pad, H_pad), param_dtype)
    w2T = w2T.at[:A, :H].set(jnp.asarray(w2, param_dtype).T)
    w2T = w2T.at[:A, H].set(b2)          # b2 rides on the bias unit
    return w1T, w2T, D, A


def mlp_policy_forward(x, prepared, *, block_b=2048,
                       compute_dtype=jnp.float32, io_dtype=jnp.float32,
                       vmem_limit_bytes=None):
    """Pallas forward of MlpPolicy: relu(x @ w1 + b1) @ w2 + b2.

    x:        [B, D] states.
    prepared: output of prepare_params() (padded/transposed, bias-folded).
    block_b:  batch-tile width along the lane axis (multiple of 128).
    io_dtype: HBM-side dtype of the transposed x copy and of the kernel output
              (bf16 halves streamed bytes on v6e/v7x; default f32 for exactness).
    """
    w1T, w2T, D, A = prepared
    H_pad, D_pad = w1T.shape
    A_pad = w2T.shape[0]
    B = x.shape[0]
    assert x.shape[1] == D, (x.shape, D)

    B_lane = _round_up(B, _LANE)

    kernel = functools.partial(_mlp_policy_kernel, compute_dtype=compute_dtype)

    if B_lane <= 2 * _LANE:
        # Tiny batch: one tile, no grid / pipeline machinery at all.
        steps = 1
        TB = B_lane
    else:
        steps = max(2, _cdiv(B_lane, max(_LANE, block_b)))
        if steps % 2:
            steps += 1          # even step count -> both v7x TCs stay busy
        TB = _round_up(_cdiv(B_lane, steps), _LANE)
    B_tiled = steps * TB

    # Single padded + transposed + bias-augmented copy of x (batch -> lanes).
    xT = jnp.zeros((D_pad, B_tiled), io_dtype)
    xT = xT.at[:D, :B].set(x.T.astype(io_dtype))
    xT = xT.at[D, :].set(1.0)            # constant-1 row -> b1 (pad cols discarded)

    if steps == 1:
        outT = pl.pallas_call(
            kernel,
            out_shape=jax.ShapeDtypeStruct((A_pad, B_tiled), io_dtype),
            in_specs=[pl.BlockSpec(memory_space=pltpu.MemorySpace.VMEM)] * 3,
            out_specs=pl.BlockSpec(memory_space=pltpu.MemorySpace.VMEM),
        )(xT, w1T, w2T)
    else:
        outT = pl.pallas_call(
            kernel,
            out_shape=jax.ShapeDtypeStruct((A_pad, B_tiled), io_dtype),
            grid_spec=pltpu.PrefetchScalarGridSpec(
                num_scalar_prefetch=0,
                grid=(steps,),
                in_specs=[
                    pl.BlockSpec((D_pad, TB), lambda i: (0, i)),      # x: streamed
                    pl.BlockSpec((H_pad, D_pad), lambda i: (0, 0)),   # w1T: resident
                    pl.BlockSpec((A_pad, H_pad), lambda i: (0, 0)),   # w2T: resident
                ],
                out_specs=pl.BlockSpec((A_pad, TB), lambda i: (0, i)),
            ),
            compiler_params=pltpu.CompilerParams(
                dimension_semantics=("parallel",),   # batch tiles -> both v7x TCs
                vmem_limit_bytes=vmem_limit_bytes,   # not needed at these tile sizes
            ),
        )(xT, w1T, w2T)

    # [A_pad, B_tiled] -> [B, A]; only useful rows/cols survive (tiny copy).
    return outT[:A, :B].T.astype(x.dtype)


def init_params(key, state_dim, hidden_dim, action_dim):
    """Deterministic init mimicking torch.nn.Linear default (U[-1/sqrt(fan_in), +])."""
    k1, k2, k3, k4 = jax.random.split(key, 4)
    lim1 = 1.0 / jnp.sqrt(jnp.float32(state_dim))
    lim2 = 1.0 / jnp.sqrt(jnp.float32(hidden_dim))
    w1 = jax.random.uniform(k1, (state_dim, hidden_dim), jnp.float32, -lim1, lim1)
    b1 = jax.random.uniform(k2, (1, hidden_dim), jnp.float32, -lim1, lim1)
    w2 = jax.random.uniform(k3, (hidden_dim, action_dim), jnp.float32, -lim2, lim2)
    b2 = jax.random.uniform(k4, (1, action_dim), jnp.float32, -lim2, lim2)
    return w1, b1, w2, b2


if __name__ == "__main__":
    # MlpPolicy(state_dim=16) defaults: action_dim=1, hidden_dim=20, hidden_layers=1
    batch = 8
    state_dim = 16
    hidden_dim = 20
    action_dim = 1

    key = jax.random.PRNGKey(0)
    k_x, k_p, k_x2 = jax.random.split(key, 3)
    s = jax.random.normal(k_x, (batch, state_dim), jnp.float32)
    w1, b1, w2, b2 = init_params(k_p, state_dim, hidden_dim, action_dim)

    # Weight padding / transposition / bias-folding done ONCE (hoisted).
    prepared = prepare_params(w1, b1, w2, b2)

    # Path 1: tiny batch -> single-tile, no-grid kernel.
    out = jax.block_until_ready(mlp_policy_forward(s, prepared))
    ref = jnp.maximum(s @ w1 + b1, 0.0) @ w2 + b2
    assert out.shape == (batch, action_dim)
    assert jnp.allclose(out, ref, atol=1e-5, rtol=1e-5), float(jnp.max(jnp.abs(out - ref)))

    # Path 2: larger batch -> batch-tiled grid (even step count, "parallel" axis).
    s2 = jax.random.normal(k_x2, (300, state_dim), jnp.float32)
    out2 = jax.block_until_ready(mlp_policy_forward(s2, prepared, block_b=2048))
    ref2 = jnp.maximum(s2 @ w1 + b1, 0.0) @ w2 + b2
    assert out2.shape == (300, action_dim)
    assert jnp.allclose(out2, ref2, atol=1e-5, rtol=1e-5), float(jnp.max(jnp.abs(out2 - ref2)))

    # TODO(synk): get_action() exploration noise (torch.distributions Normal +
    # clamp) is sampling logic outside forward(); not implemented as a kernel.

    print("KERNEL_OK")
</pallas_src>

<mosaic_0001>
module attributes {stable_mosaic.version = 11 : i64} {
  func.func @_mlp_policy_kernel(%arg0: memref<24x128xf32, #tpu.memory_space<vmem>>, %arg1: memref<24x24xf32, #tpu.memory_space<vmem>>, %arg2: memref<8x24xf32, #tpu.memory_space<vmem>>, %arg3: memref<8x128xf32, #tpu.memory_space<vmem>>) attributes {dimension_semantics = [], scalar_prefetch = 0 : i64, scratch_operands = 0 : i64, tpu.core_type = #tpu.core_type<tc>} {
    %c0 = arith.constant 0 : index
    %c0_0 = arith.constant 0 : index
    %0 = vector.load %arg0[%c0, %c0_0] : memref<24x128xf32, #tpu.memory_space<vmem>>, vector<24x128xf32>
    %c0_1 = arith.constant 0 : index
    %c0_2 = arith.constant 0 : index
    %1 = vector.load %arg1[%c0_1, %c0_2] : memref<24x24xf32, #tpu.memory_space<vmem>>, vector<24x24xf32>
    %cst = arith.constant dense<0.000000e+00> : vector<24x128xf32>
    %2 = tpu.matmul %1, %0, %cst {dimension_numbers = #tpu.dot_dimension_numbers<[1], [0], [0], [1], [0, 0, 1, 1], [], []>} : vector<24x24xf32>, vector<24x128xf32>, vector<24x128xf32> -> vector<24x128xf32>
    %cst_3 = arith.constant 0.000000e+00 : f32
    %3 = vector.broadcast %cst_3 : f32 to vector<24x128xf32>
    %4 = arith.maximumf %2, %3 : vector<24x128xf32>
    %c0_4 = arith.constant 0 : index
    %c0_5 = arith.constant 0 : index
    %5 = vector.load %arg2[%c0_4, %c0_5] : memref<8x24xf32, #tpu.memory_space<vmem>>, vector<8x24xf32>
    %cst_6 = arith.constant dense<0.000000e+00> : vector<8x128xf32>
    %6 = tpu.matmul %5, %4, %cst_6 {dimension_numbers = #tpu.dot_dimension_numbers<[1], [0], [0], [1], [0, 0, 1, 1], [], []>} : vector<8x24xf32>, vector<24x128xf32>, vector<8x128xf32> -> vector<8x128xf32>
    %c0_7 = arith.constant 0 : index
    %c0_8 = arith.constant 0 : index
    %7 = vector.load %arg3[%c0_7, %c0_8] : memref<8x128xf32, #tpu.memory_space<vmem>>, vector<8x128xf32>
    tpu.vector_store %arg3[%c0_7, %c0_8], %6 {strides = array<i32>} : memref<8x128xf32, #tpu.memory_space<vmem>>, vector<8x128xf32>,
    return
  }
}

</mosaic_0001>

<llo_original>
// kernel: tpu_custom_call.1
$region0: #{tpu_custom_call.1}
  #allocation0 [shape = 'u32[]', space=smem, size = 0x4, offset = 0x4, fixed_abs, tag = 'smem constant byte address 0x4 - core index']
  #allocation1 [shape = 'u32[144,128]{1,0:T(1,128)}', space=vmem, size = 0x12000, scoped, tag = 'internal scratch']
  %s0 = inlined_call_operand.hbm [shape: f32[24,128], index: 0, kind: input, shape index: {}]
  %s1 = inlined_call_operand.hbm [shape: f32[24,24], index: 1, kind: input, shape index: {}]
  %s2 = inlined_call_operand.hbm [shape: f32[8,24], index: 2, kind: input, shape index: {}]
  %s3 = inlined_call_operand.hbm [shape: f32[8,128], index: 3, kind: output, shape index: {}]
  %s4 = sld [smem:[#allocation0]]
  $region34: #{tpu_custom_call.1} parent=0
    _
  %s6 = ssub.s32 1, %s4
  %s7 = scalar_select 0, %s6, %s4
  $region1: #{tpu_custom_call.1} parent=0
    #allocation2 [shape = 'u8[12288]{0}', space=vmem, size = 0x3000, scoped, tag = 'input window, operand 0, single buffered']
    #allocation3 [shape = 's32[1]{0}', space=sflag, size = 0x4, scoped, tag = 'scoped memory for tpu_custom_call.1']
    #allocation4 [shape = 's32[1]{0}', space=sflag, size = 0x4, scoped, tag = 'scoped memory for tpu_custom_call.1']
    #allocation5 [shape = 'u8[12288]{0}', space=vmem, size = 0x3000, scoped, tag = 'input window, operand 1, single buffered']
    #allocation6 [shape = 's32[1]{0}', space=sflag, size = 0x4, scoped, tag = 'scoped memory for tpu_custom_call.1']
    #allocation7 [shape = 'u8[4096]{0}', space=vmem, size = 0x1000, scoped, tag = 'input window, operand 2, single buffered']
    #allocation8 [shape = 'u8[4096]{0}', space=vmem, size = 0x1000, scoped, tag = 'output window, operand 0, single buffered']
    %8 = vsyncpa [#allocation3], 0
    %9 = vsyncpa [#allocation6], 0
    %10 = vsyncpa [#allocation4], 0
    // Predicated region
    $region2: #{tpu_custom_call.1} parent=1 // pred_check
      _
    $region3: #{tpu_custom_call.1} parent=1 // pred_check_branch
      %12 = sbr.rel (0) target = $region5
    $region4: #{tpu_custom_call.1} parent=1 // pred_region
      %s14 = ssub.s32 384, 384
      %15 = vsyncadd [#allocation3], %s14
      %s16 = sshll.u32 [#allocation2], 4
      %s17 = int_to_ptr.vmem [resolvable:$true] %s16
      %22 = dma.hbm_to_vmem [thread:$0]  %s0, 384, %s17, [#allocation3], 128, 128, 8
    $region5: #{tpu_custom_call.1} parent=1 // pred_fallthru
      _
    // Predicated region
    $region6: #{tpu_custom_call.1} parent=1 // pred_check
      _
    $region7: #{tpu_custom_call.1} parent=1 // pred_check_branch
      %24 = sbr.rel (0) target = $region9
    $region8: #{tpu_custom_call.1} parent=1 // pred_region
      %s26 = ssub.s32 384, 384
      %27 = vsyncadd [#allocation6], %s26
      %s28 = sshll.u32 [#allocation5], 4
      %s29 = int_to_ptr.vmem [resolvable:$true] %s28
      %34 = dma.hbm_to_vmem [thread:$0]  %s1, 384, %s29, [#allocation6], 128, 128, 8
    $region9: #{tpu_custom_call.1} parent=1 // pred_fallthru
      _
    // Predicated region
    $region10: #{tpu_custom_call.1} parent=1 // pred_check
      _
    $region11: #{tpu_custom_call.1} parent=1 // pred_check_branch
      %36 = sbr.rel (0) target = $region13
    $region12: #{tpu_custom_call.1} parent=1 // pred_region
      %s38 = ssub.s32 128, 128
      %39 = vsyncadd [#allocation6], %s38
      %s41 = sshll.u32 [#allocation7], 4
      %s42 = int_to_ptr.vmem [resolvable:$true] %s41
      %44 = dma.hbm_to_vmem [thread:$0]  %s2, 128, %s42, [#allocation6]
    $region13: #{tpu_custom_call.1} parent=1 // pred_fallthru
      _
    // Predicated region
    $region14: #{tpu_custom_call.1} parent=1 // pred_check
      _
    $region15: #{tpu_custom_call.1} parent=1 // pred_check_branch
      %46 = sbr.rel (0) target = $region17
    $region16: #{tpu_custom_call.1} parent=1 // pred_region
      %47 = dma.done [#allocation3], 384
    $region17: #{tpu_custom_call.1} parent=1 // pred_fallthru
      _
    // Predicated region
    $region18: #{tpu_custom_call.1} parent=1 // pred_check
      _
    $region19: #{tpu_custom_call.1} parent=1 // pred_check_branch
      %49 = sbr.rel (0) target = $region21
    $region20: #{tpu_custom_call.1} parent=1 // pred_region
      %50 = dma.done [#allocation6], 384
    $region21: #{tpu_custom_call.1} parent=1 // pred_fallthru
      _
    // Predicated region
    $region22: #{tpu_custom_call.1} parent=1 // pred_check
      _
    $region23: #{tpu_custom_call.1} parent=1 // pred_check_branch
      %52 = sbr.rel (0) target = $region25
    $region24: #{tpu_custom_call.1} parent=1 // pred_region
      %53 = dma.done [#allocation6], 128
    $region25: #{tpu_custom_call.1} parent=1 // pred_fallthru
      _
    %v54 = vld [vmem:[#allocation2] sm:$0xff]
    %v55 = vld [vmem:[#allocation2 + $0x8] sm:$0xff]
    %v56 = vld [vmem:[#allocation2 + $0x10] sm:$0xff]
    %v57 = vld [vmem:[#allocation5] sm:$0xff]
    %v58 = vld [vmem:[#allocation5 + $0x8] sm:$0xff]
    %v59 = vld [vmem:[#allocation5 + $0x10] sm:$0xff]
    %vm60 = vcmask 195584
    %v62 = vsel %vm60, %v57, 0
    %v65 = vsel %vm60, %v58, 0
    %v68 = vsel %vm60, %v59, 0
    %70 = vmatprep.subr.mxu0 0.0
    %71 = vmatpush1.msra.mxu0 0.0
    %72 = vmatprep.subr.mxu0 0.0
    %73 = vmatpush1.msra.mxu0 0.0
    %74 = vmatprep.subr.mxu0 0.0
    %75 = vmatpush1.msra.mxu0 0.0
    %76 = vmatprep.subr.mxu0 0.0
    %77 = vmatpush1.msra.mxu0 0.0
    %78 = vmatprep.subr.mxu0 0.0
    %79 = vmatpush1.msra.mxu0 0.0
    %80 = vmatprep.subr.mxu0 0.0
    %81 = vmatpush1.msra.mxu0 0.0
    %82 = vmatprep.subr.mxu0 0.0
    %83 = vmatpush1.msra.mxu0 0.0
    %84 = vmatprep.subr.mxu0 0.0
    %85 = vmatpush1.msra.mxu0 0.0
    %86 = vmatprep.subr.mxu0 0.0
    %87 = vmatpush1.msra.mxu0 0.0
    %88 = vmatprep.subr.mxu0 0.0
    %89 = vmatpush1.msra.mxu0 0.0
    %90 = vmatprep.subr.mxu0 0.0
    %91 = vmatpush1.msra.mxu0 0.0
    %92 = vmatprep.subr.mxu0 0.0
    %93 = vmatpush1.msra.mxu0 0.0
    %94 = vmatprep.subr.mxu0 0.0
    %95 = vmatpush1.msra.mxu0 0.0
    %96 = vmatprep.subr.mxu0 0.0
    %97 = vmatpush1.msra.mxu0 %v56
    %98 = vmatprep.subr.mxu0 0.0
    %99 = vmatpush1.msra.mxu0 %v55
    %100 = vmatprep.subr.mxu0 0.0
    %101 = vmatpush1.msra.mxu0 %v54
    %102 = vmatprep.subr.mxu0 0.0
    %103 = vmatpush2.msra.mxu0 0.0
    %104 = vmatprep.subr.mxu0 0.0
    %105 = vmatpush2.msra.mxu0 0.0
    %106 = vmatprep.subr.mxu0 0.0
    %107 = vmatpush2.msra.mxu0 0.0
    %108 = vmatprep.subr.mxu0 0.0
    %109 = vmatpush2.msra.mxu0 0.0
    %110 = vmatprep.subr.mxu0 0.0
    %111 = vmatpush2.msra.mxu0 0.0
    %112 = vmatprep.subr.mxu0 0.0
    %113 = vmatpush2.msra.mxu0 0.0
    %114 = vmatprep.subr.mxu0 0.0
    %115 = vmatpush2.msra.mxu0 0.0
    %116 = vmatprep.subr.mxu0 0.0
    %117 = vmatpush2.msra.mxu0 0.0
    %118 = vmatprep.subr.mxu0 0.0
    %119 = vmatpush2.msra.mxu0 0.0
    %120 = vmatprep.subr.mxu0 0.0
    %121 = vmatpush2.msra.mxu0 0.0
    %122 = vmatprep.subr.mxu0 0.0
    %123 = vmatpush2.msra.mxu0 0.0
    %124 = vmatprep.subr.mxu0 0.0
    %125 = vmatpush2.msra.mxu0 0.0
    %126 = vmatprep.subr.mxu0 0.0
    %127 = vmatpush2.msra.mxu0 0.0
    %128 = vmatprep.subr.mxu0 0.0
    %129 = vmatpush2.msra.mxu0 0.0
    %130 = vmatprep.subr.mxu0 0.0
    %131 = vmatpush2.msra.mxu0 0.0
    %132 = vmatprep.subr.mxu0 0.0
    %133 = vmatpush2.msra.mxu0 0.0
    %134 = vmatprep.mubr.f32.mxu0 0.0
    %135 = vmatmul.mubr.f32.gmra.mxu0 %v62
    %v136 = vpop.f32.mrf.mxu0
    %v137 = vadd.f32 0.0, %v136
    %v138 = vpop.f32.mrf.mxu0
    %139 = vmatprep.mubr.f32.mxu0 0.0
    %140 = vmatmul.mubr.f32.gmra.mxu0 %v65
    %v141 = vpop.f32.mrf.mxu0
    %v142 = vadd.f32 0.0, %v141
    %v143 = vpop.f32.mrf.mxu0
    %144 = vmatprep.mubr.f32.mxu0 0.0
    %145 = vmatmul.mubr.f32.gmra.mxu0 %v68
    %v146 = vpop.f32.mrf.mxu0
    %v147 = vadd.f32 0.0, %v146
    %v148 = vpop.f32.mrf.mxu0
    %149 = vdwg.mxu0
    %v150 = vmax.f32 %v137, 0.0
    %v151 = vmax.f32 %v142, 0.0
    %v152 = vmax.f32 %v147, 0.0
    %v153 = vld [vmem:[#allocation7] sm:$0xff]
    %v155 = vsel %vm60, %v153, 0
    %157 = vmatprep.subr.mxu0 0.0
    %158 = vmatpush1.msra.mxu0 0.0
    %159 = vmatprep.subr.mxu0 0.0
    %160 = vmatpush1.msra.mxu0 0.0
    %161 = vmatprep.subr.mxu0 0.0
    %162 = vmatpush1.msra.mxu0 0.0
    %163 = vmatprep.subr.mxu0 0.0
    %164 = vmatpush1.msra.mxu0 0.0
    %165 = vmatprep.subr.mxu0 0.0
    %166 = vmatpush1.msra.mxu0 0.0
    %167 = vmatprep.subr.mxu0 0.0
    %168 = vmatpush1.msra.mxu0 0.0
    %169 = vmatprep.subr.mxu0 0.0
    %170 = vmatpush1.msra.mxu0 0.0
    %171 = vmatprep.subr.mxu0 0.0
    %172 = vmatpush1.msra.mxu0 0.0
    %173 = vmatprep.subr.mxu0 0.0
    %174 = vmatpush1.msra.mxu0 0.0
    %175 = vmatprep.subr.mxu0 0.0
    %176 = vmatpush1.msra.mxu0 0.0
    %177 = vmatprep.subr.mxu0 0.0
    %178 = vmatpush1.msra.mxu0 0.0
    %179 = vmatprep.subr.mxu0 0.0
    %180 = vmatpush1.msra.mxu0 0.0
    %181 = vmatprep.subr.mxu0 0.0
    %182 = vmatpush1.msra.mxu0 0.0
    %183 = vmatprep.subr.mxu0 0.0
    %184 = vmatpush1.msra.mxu0 %v152
    %185 = vmatprep.subr.mxu0 0.0
    %186 = vmatpush1.msra.mxu0 %v151
    %187 = vmatprep.subr.mxu0 0.0
    %188 = vmatpush1.msra.mxu0 %v150
    %189 = vmatprep.subr.mxu0 0.0
    %190 = vmatpush2.msra.mxu0 0.0
    %191 = vmatprep.subr.mxu0 0.0
    %192 = vmatpush2.msra.mxu0 0.0
    %193 = vmatprep.subr.mxu0 0.0
    %194 = vmatpush2.msra.mxu0 0.0
    %195 = vmatprep.subr.mxu0 0.0
    %196 = vmatpush2.msra.mxu0 0.0
    %197 = vmatprep.subr.mxu0 0.0
    %198 = vmatpush2.msra.mxu0 0.0
    %199 = vmatprep.subr.mxu0 0.0
    %200 = vmatpush2.msra.mxu0 0.0
    %201 = vmatprep.subr.mxu0 0.0
    %202 = vmatpush2.msra.mxu0 0.0
    %203 = vmatprep.subr.mxu0 0.0
    %204 = vmatpush2.msra.mxu0 0.0
    %205 = vmatprep.subr.mxu0 0.0
    %206 = vmatpush2.msra.mxu0 0.0
    %207 = vmatprep.subr.mxu0 0.0
    %208 = vmatpush2.msra.mxu0 0.0
    %209 = vmatprep.subr.mxu0 0.0
    %210 = vmatpush2.msra.mxu0 0.0
    %211 = vmatprep.subr.mxu0 0.0
    %212 = vmatpush2.msra.mxu0 0.0
    %213 = vmatprep.subr.mxu0 0.0
    %214 = vmatpush2.msra.mxu0 0.0
    %215 = vmatprep.subr.mxu0 0.0
    %216 = vmatpush2.msra.mxu0 0.0
    %217 = vmatprep.subr.mxu0 0.0
    %218 = vmatpush2.msra.mxu0 0.0
    %219 = vmatprep.subr.mxu0 0.0
    %220 = vmatpush2.msra.mxu0 0.0
    %221 = vmatprep.mubr.f32.mxu0 0.0
    %222 = vmatmul.mubr.f32.gmra.mxu0 %v155
    %v223 = vpop.f32.mrf.mxu0
    %v224 = vadd.f32 0.0, %v223
    %v225 = vpop.f32.mrf.mxu0
    %226 = vdwg.mxu0
    %227 = vst [vmem:[#allocation8] sm:$0xff] %v224
    // Predicated region
    $region26: #{tpu_custom_call.1} parent=1 // pred_check
      _
    $region27: #{tpu_custom_call.1} parent=1 // pred_check_branch
      %229 = sbr.rel (0) target = $region29
    $region28: #{tpu_custom_call.1} parent=1 // pred_region
      %s231 = ssub.s32 128, 128
      %232 = vsyncadd [#allocation4], %s231
      %s234 = sshll.u32 [#allocation8], 4
      %s235 = int_to_ptr.vmem [resolvable:$true] %s234
      %237 = dma.vmem_to_hbm [thread:$0]  %s235, 128, %s3, [#allocation4]
    $region29: #{tpu_custom_call.1} parent=1 // pred_fallthru
      _
    // Predicated region
    $region30: #{tpu_custom_call.1} parent=1 // pred_check
      _
    $region31: #{tpu_custom_call.1} parent=1 // pred_check_branch
      %239 = sbr.rel (0) target = $region33
    $region32: #{tpu_custom_call.1} parent=1 // pred_region
      %240 = dma.done [#allocation4], 128
    $region33: #{tpu_custom_call.1} parent=1 // pred_fallthru
      _
    %241 = vsyncpa [#allocation3], 1
    %242 = vsyncpa [#allocation6], 1
    %243 = vsyncpa [#allocation4], 1

</llo_original>
